<compile_context>
chip_gen: v7x
topology: tpu7x:2x2x1
jax: 0.10.0
libtpu: 0.0.40
codegen_flags: <defaults>
</compile_context>

<pallas_src>
import functools

import jax
import jax.numpy as jnp
from jax.experimental import pallas as pl
from jax.experimental.pallas import tpu as pltpu

IN_DIM = 6
HIDDEN = 32
OUT_DIM = 3


def _policy_kernel(x_ref, w1t_ref, b1_ref, w2t_ref, b2_ref, o_ref):
    # x: (IN, TB)  w1t: (H, IN)  b1: (H, 1)  w2t: (OUT, H)  b2: (OUT, 1)  o: (OUT, TB)
    x = x_ref[...]
    # fc1 + ReLU -> (H, TB)
    h = jnp.dot(w1t_ref[...], x, preferred_element_type=jnp.float32) + b1_ref[...]
    h = jnp.maximum(h, 0.0)
    # fc2 -> (OUT, TB)
    logits = jnp.dot(w2t_ref[...], h, preferred_element_type=jnp.float32) + b2_ref[...]
    # softmax over the action axis (axis 0, only 3 rows -> cheap sublane reduce)
    m = jnp.max(logits, axis=0, keepdims=True)
    e = jnp.exp(logits - m)
    denom = jnp.sum(e, axis=0, keepdims=True)
    inv = 1.0 / denom                      # exact divide: keeps row-sums == 1
    o_ref[...] = e * inv


def _round_up(n, m):
    return ((n + m - 1) // m) * m


@functools.partial(jax.jit, static_argnames=("batch_tile",))
def policy_acrobot_forward(x, w1, b1, w2, b2, *, batch_tile=512):
    """x: (B, 6); w1: (6, H); b1: (1, H); w2: (H, 3); b2: (1, 3) -> probs (B, 3)."""
    B = x.shape[0]
    # Batch tile: multiple of 128 lanes; small enough (a few hundred KiB per
    # double-buffered pair) to fit comfortably on v5e (16 MiB scoped) and v7x
    # (64 MiB physical) with one portable config.
    tb = min(batch_tile, _round_up(B, 128))
    b_pad = _round_up(B, tb)

    # feature-major (batch-on-lanes) operands
    xt = jnp.pad(x.astype(jnp.float32), ((0, b_pad - B), (0, 0))).T       # (IN, B_pad)
    w1t = w1.astype(jnp.float32).T                                        # (H, IN)
    b1c = b1.astype(jnp.float32).reshape(HIDDEN, 1)                       # (H, 1)
    w2t = w2.astype(jnp.float32).T                                        # (OUT, H)
    b2c = b2.astype(jnp.float32).reshape(OUT_DIM, 1)                      # (OUT, 1)

    out = pl.pallas_call(
        _policy_kernel,
        out_shape=jax.ShapeDtypeStruct((OUT_DIM, b_pad), jnp.float32),
        grid_spec=pltpu.PrefetchScalarGridSpec(
            num_scalar_prefetch=0,
            grid=(b_pad // tb,),
            in_specs=[
                pl.BlockSpec((IN_DIM, tb), lambda i: (0, i)),
                pl.BlockSpec((HIDDEN, IN_DIM), lambda i: (0, 0)),   # resident weights
                pl.BlockSpec((HIDDEN, 1), lambda i: (0, 0)),
                pl.BlockSpec((OUT_DIM, HIDDEN), lambda i: (0, 0)),
                pl.BlockSpec((OUT_DIM, 1), lambda i: (0, 0)),
            ],
            out_specs=pl.BlockSpec((OUT_DIM, tb), lambda i: (0, i)),
        ),
        compiler_params=pltpu.CompilerParams(
            dimension_semantics=("parallel",),   # v7x: shard batch tiles over both TCs
        ),
    )(xt, w1t, b1c, w2t, b2c)
    # back to the PyTorch (B, OUT) layout, dropping lane padding
    return out.T[:B]


def init_params(key, hidden_size=HIDDEN):
    # Mimics nn.Linear default init: U(-1/sqrt(fan_in), 1/sqrt(fan_in)).
    k1, k2, k3, k4 = jax.random.split(key, 4)
    bound1 = 1.0 / jnp.sqrt(IN_DIM)
    bound2 = 1.0 / jnp.sqrt(hidden_size)
    w1 = jax.random.uniform(k1, (IN_DIM, hidden_size), jnp.float32, -bound1, bound1)
    b1 = jax.random.uniform(k2, (1, hidden_size), jnp.float32, -bound1, bound1)
    w2 = jax.random.uniform(k3, (hidden_size, OUT_DIM), jnp.float32, -bound2, bound2)
    b2 = jax.random.uniform(k4, (1, OUT_DIM), jnp.float32, -bound2, bound2)
    return w1, b1, w2, b2


def reference_forward(x, w1, b1, w2, b2):
    h = jnp.maximum(x @ w1 + b1, 0.0)
    logits = h @ w2 + b2
    return jax.nn.softmax(logits, axis=1)


if __name__ == "__main__":
    key = jax.random.PRNGKey(0)
    kx, kx2, kp = jax.random.split(key, 3)
    w1, b1, w2, b2 = init_params(kp)

    # Small demo batch (like act()), Acrobot-v1 obs dim = 6.
    x_small = jax.random.normal(kx, (4, IN_DIM), jnp.float32)
    probs_small = policy_acrobot_forward(x_small, w1, b1, w2, b2)
    jax.block_until_ready(probs_small)
    ref_small = reference_forward(x_small, w1, b1, w2, b2)
    assert probs_small.shape == (4, OUT_DIM)
    assert jnp.allclose(probs_small, ref_small, atol=1e-3, rtol=1e-3)
    assert jnp.allclose(jnp.sum(probs_small, axis=1), 1.0, atol=2e-3)

    # Larger, non-multiple batch exercises grid tiling (2 grid steps) + padding.
    x_big = jax.random.normal(kx2, (640, IN_DIM), jnp.float32)
    probs_big = policy_acrobot_forward(x_big, w1, b1, w2, b2)
    jax.block_until_ready(probs_big)
    ref_big = reference_forward(x_big, w1, b1, w2, b2)
    assert probs_big.shape == (640, OUT_DIM)
    assert jnp.allclose(probs_big, ref_big, atol=1e-3, rtol=1e-3)
    assert jnp.allclose(jnp.sum(probs_big, axis=1), 1.0, atol=2e-3)

    print("KERNEL_OK")
</pallas_src>

<mosaic_0001>
module attributes {stable_mosaic.version = 11 : i64} {
  func.func @_policy_kernel(%arg0: i32, %arg1: memref<6x128xf32, #tpu.memory_space<vmem>>, %arg2: memref<32x6xf32, #tpu.memory_space<vmem>>, %arg3: memref<32x1xf32, #tpu.memory_space<vmem>>, %arg4: memref<3x32xf32, #tpu.memory_space<vmem>>, %arg5: memref<3x1xf32, #tpu.memory_space<vmem>>, %arg6: memref<3x128xf32, #tpu.memory_space<vmem>>) attributes {dimension_semantics = [#tpu.dimension_semantics<parallel>], iteration_bounds = array<i64: 1>, scalar_prefetch = 0 : i64, scratch_operands = 0 : i64, tpu.core_type = #tpu.core_type<tc>, window_params = [{transform_indices = @transform_0, window_bounds = array<i64: 6, 128>}, {pipeline_mode = #tpu.pipeline_mode<synchronous>, transform_indices = @transform_1, window_bounds = array<i64: 32, 6>}, {pipeline_mode = #tpu.pipeline_mode<synchronous>, transform_indices = @transform_2, window_bounds = array<i64: 32, 1>}, {pipeline_mode = #tpu.pipeline_mode<synchronous>, transform_indices = @transform_3, window_bounds = array<i64: 3, 32>}, {pipeline_mode = #tpu.pipeline_mode<synchronous>, transform_indices = @transform_4, window_bounds = array<i64: 3, 1>}, {transform_indices = @transform_5, window_bounds = array<i64: 3, 128>}]} {
    %c0 = arith.constant 0 : index
    %c0_0 = arith.constant 0 : index
    %0 = vector.load %arg1[%c0, %c0_0] : memref<6x128xf32, #tpu.memory_space<vmem>>, vector<6x128xf32>
    %c0_1 = arith.constant 0 : index
    %c0_2 = arith.constant 0 : index
    %1 = vector.load %arg2[%c0_1, %c0_2] : memref<32x6xf32, #tpu.memory_space<vmem>>, vector<32x6xf32>
    %cst = arith.constant dense<0.000000e+00> : vector<32x128xf32>
    %2 = tpu.matmul %1, %0, %cst {dimension_numbers = #tpu.dot_dimension_numbers<[1], [0], [0], [1], [0, 0, 1, 1], [], []>} : vector<32x6xf32>, vector<6x128xf32>, vector<32x128xf32> -> vector<32x128xf32>
    %c0_3 = arith.constant 0 : index
    %c0_4 = arith.constant 0 : index
    %3 = vector.load %arg3[%c0_3, %c0_4] : memref<32x1xf32, #tpu.memory_space<vmem>>, vector<32x1xf32>
    %4 = vector.broadcast %3 : vector<32x1xf32> to vector<32x128xf32>
    %5 = arith.addf %2, %4 : vector<32x128xf32>
    %cst_5 = arith.constant 0.000000e+00 : f32
    %6 = vector.broadcast %cst_5 : f32 to vector<32x128xf32>
    %7 = arith.maximumf %5, %6 : vector<32x128xf32>
    %c0_6 = arith.constant 0 : index
    %c0_7 = arith.constant 0 : index
    %8 = vector.load %arg4[%c0_6, %c0_7] : memref<3x32xf32, #tpu.memory_space<vmem>>, vector<3x32xf32>
    %cst_8 = arith.constant dense<0.000000e+00> : vector<3x128xf32>
    %9 = tpu.matmul %8, %7, %cst_8 {dimension_numbers = #tpu.dot_dimension_numbers<[1], [0], [0], [1], [0, 0, 1, 1], [], []>} : vector<3x32xf32>, vector<32x128xf32>, vector<3x128xf32> -> vector<3x128xf32>
    %c0_9 = arith.constant 0 : index
    %c0_10 = arith.constant 0 : index
    %10 = vector.load %arg5[%c0_9, %c0_10] : memref<3x1xf32, #tpu.memory_space<vmem>>, vector<3x1xf32>
    %11 = vector.broadcast %10 : vector<3x1xf32> to vector<3x128xf32>
    %12 = arith.addf %9, %11 : vector<3x128xf32>
    %cst_11 = arith.constant dense<0xFF800000> : vector<128xf32>
    %13 = vector.multi_reduction <maximumf>, %12, %cst_11 [0] : vector<3x128xf32> to vector<128xf32>
    %14 = vector.shape_cast %13 : vector<128xf32> to vector<1x128xf32>
    %15 = vector.broadcast %14 : vector<1x128xf32> to vector<3x128xf32>
    %16 = arith.subf %12, %15 : vector<3x128xf32>
    %17 = math.exp %16 : vector<3x128xf32>
    %cst_12 = arith.constant dense<0.000000e+00> : vector<128xf32>
    %18 = vector.multi_reduction <add>, %17, %cst_12 [0] : vector<3x128xf32> to vector<128xf32>
    %19 = vector.shape_cast %18 : vector<128xf32> to vector<1x128xf32>
    %cst_13 = arith.constant 1.000000e+00 : f32
    %20 = vector.broadcast %cst_13 : f32 to vector<1x128xf32>
    %21 = arith.divf %20, %19 : vector<1x128xf32>
    %22 = vector.broadcast %21 : vector<1x128xf32> to vector<3x128xf32>
    %23 = arith.mulf %17, %22 : vector<3x128xf32>
    %c0_14 = arith.constant 0 : index
    %c0_15 = arith.constant 0 : index
    %24 = vector.load %arg6[%c0_14, %c0_15] : memref<3x128xf32, #tpu.memory_space<vmem>>, vector<3x128xf32>
    tpu.vector_store %arg6[%c0_14, %c0_15], %23 {strides = array<i32>} : memref<3x128xf32, #tpu.memory_space<vmem>>, vector<3x128xf32>,
    return
  }
  func.func @transform_0(%arg0: i32) -> (i32, i32) {
    %c0_i32 = arith.constant 0 : i32
    %c0_i32_0 = arith.constant 0 : i32
    return %c0_i32, %arg0 : i32, i32
  }
  func.func @transform_1(%arg0: i32) -> (i32, i32) {
    %c0_i32 = arith.constant 0 : i32
    %c0_i32_0 = arith.constant 0 : i32
    %c0_i32_1 = arith.constant 0 : i32
    return %c0_i32, %c0_i32_0 : i32, i32
  }
  func.func @transform_2(%arg0: i32) -> (i32, i32) {
    %c0_i32 = arith.constant 0 : i32
    %c0_i32_0 = arith.constant 0 : i32
    %c0_i32_1 = arith.constant 0 : i32
    return %c0_i32, %c0_i32_0 : i32, i32
  }
  func.func @transform_3(%arg0: i32) -> (i32, i32) {
    %c0_i32 = arith.constant 0 : i32
    %c0_i32_0 = arith.constant 0 : i32
    %c0_i32_1 = arith.constant 0 : i32
    return %c0_i32, %c0_i32_0 : i32, i32
  }
  func.func @transform_4(%arg0: i32) -> (i32, i32) {
    %c0_i32 = arith.constant 0 : i32
    %c0_i32_0 = arith.constant 0 : i32
    %c0_i32_1 = arith.constant 0 : i32
    return %c0_i32, %c0_i32_0 : i32, i32
  }
  func.func @transform_5(%arg0: i32) -> (i32, i32) {
    %c0_i32 = arith.constant 0 : i32
    %c0_i32_0 = arith.constant 0 : i32
    return %c0_i32, %arg0 : i32, i32
  }
}

</mosaic_0001>

<llo_original>
// kernel: policy_acrobot_forward.1
$region0: #{policy_acrobot_forward.1}
  #allocation0 [shape = 'u32[]', space=smem, size = 0x4, offset = 0x4, fixed_abs, tag = 'smem constant byte address 0x4 - core index']
  #allocation1 [shape = 'u32[144,128]{1,0:T(1,128)}', space=vmem, size = 0x12000, scoped, tag = 'internal scratch']
  %s0 = inlined_call_operand.vmem [shape: f32[6,128], index: 0, kind: input, shape index: {}]
  %s1 = inlined_call_operand.vmem [shape: f32[32,6], index: 1, kind: input, shape index: {}]
  %s2 = inlined_call_operand.vmem [shape: f32[32,1], index: 2, kind: input, shape index: {}]
  %s3 = inlined_call_operand.vmem [shape: f32[3,32], index: 3, kind: input, shape index: {}]
  %s4 = inlined_call_operand.vmem [shape: f32[3,1], index: 4, kind: input, shape index: {}]
  %s5 = inlined_call_operand.vmem [shape: f32[3,128], index: 5, kind: output, shape index: {}]
  %s6 = sld [smem:[#allocation0]]
  $region30: #{policy_acrobot_forward.1} parent=0
    _
  %s8 = ssub.s32 1, %s6
  %s9 = scalar_select 0, %s8, %s6
  // Predicated region
  $region2: #{policy_acrobot_forward.1} parent=0 // pred_check
    _
  $region3: #{policy_acrobot_forward.1} parent=0 // pred_check_branch
    %11 = sbr.rel (0) target = $region5
  $region4: #{policy_acrobot_forward.1} parent=0 // pred_region
    _
  $region5: #{policy_acrobot_forward.1} parent=0 // pred_fallthru
    _
  // Predicated region
  $region6: #{policy_acrobot_forward.1} parent=0 // pred_check
    _
  $region7: #{policy_acrobot_forward.1} parent=0 // pred_check_branch
    %13 = sbr.rel (0) target = $region9
  $region8: #{policy_acrobot_forward.1} parent=0 // pred_region
    _
  $region9: #{policy_acrobot_forward.1} parent=0 // pred_fallthru
    _
  // Predicated region
  $region10: #{policy_acrobot_forward.1} parent=0 // pred_check
    _
  $region11: #{policy_acrobot_forward.1} parent=0 // pred_check_branch
    %15 = sbr.rel (0) target = $region13
  $region12: #{policy_acrobot_forward.1} parent=0 // pred_region
    _
  $region13: #{policy_acrobot_forward.1} parent=0 // pred_fallthru
    _
  // Predicated region
  $region14: #{policy_acrobot_forward.1} parent=0 // pred_check
    _
  $region15: #{policy_acrobot_forward.1} parent=0 // pred_check_branch
    %17 = sbr.rel (0) target = $region17
  $region16: #{policy_acrobot_forward.1} parent=0 // pred_region
    _
  $region17: #{policy_acrobot_forward.1} parent=0 // pred_fallthru
    _
  // Predicated region
  $region18: #{policy_acrobot_forward.1} parent=0 // pred_check
    _
  $region19: #{policy_acrobot_forward.1} parent=0 // pred_check_branch
    %19 = sbr.rel (0) target = $region21
  $region20: #{policy_acrobot_forward.1} parent=0 // pred_region
    _
  $region21: #{policy_acrobot_forward.1} parent=0 // pred_fallthru
    _
  %v20 = vld [vmem:[%s0] sm:$0x3f]
  %v21 = vld [vmem:[%s1] sm:$0xff]
  %v22 = vld [vmem:[%s1 + $0x8] sm:$0xff]
  %v23 = vld [vmem:[%s1 + $0x10] sm:$0xff]
  %v24 = vld [vmem:[%s1 + $0x18] sm:$0xff]
  %v25 = vld [vmem:[%s2] sm:$0xff]
  %v26 = vld [vmem:[%s2 + $0x8] sm:$0xff]
  %v27 = vld [vmem:[%s2 + $0x10] sm:$0xff]
  %v28 = vld [vmem:[%s2 + $0x18] sm:$0xff]
  %30 = vset.pattern.permute.xlu0 0
  %31 = vperm.xlu0 %30, %v25
  %v32 = vpop.permute.xlu0 %31
  %35 = vset.pattern.permute.xlu0 0
  %36 = vperm.xlu0 %35, %v26
  %v37 = vpop.permute.xlu0 %36
  %40 = vset.pattern.permute.xlu0 0
  %41 = vperm.xlu0 %40, %v27
  %v42 = vpop.permute.xlu0 %41
  %45 = vset.pattern.permute.xlu0 0
  %46 = vperm.xlu0 %45, %v28
  %v47 = vpop.permute.xlu0 %46
  %vm49 = vcmask 48128
  %v51 = vsel %vm49, %v21, 0
  %v54 = vsel %vm49, %v22, 0
  %v57 = vsel %vm49, %v23, 0
  %v60 = vsel %vm49, %v24, 0
  %vm62 = vcmask 1045504
  %v64 = vsel %vm62, %v20, 0
  %66 = vmatprep.subr.mxu0 0.0
  %67 = vmatpush1.msra.mxu0 %v64
  %68 = vmatprep.subr.mxu0 0.0
  %69 = vmatpush1.msra.mxu0 0.0
  %70 = vmatprep.subr.mxu0 0.0
  %71 = vmatpush1.msra.mxu0 0.0
  %72 = vmatprep.subr.mxu0 0.0
  %73 = vmatpush1.msra.mxu0 0.0
  %74 = vmatprep.subr.mxu0 0.0
  %75 = vmatpush1.msra.mxu0 0.0
  %76 = vmatprep.subr.mxu0 0.0
  %77 = vmatpush1.msra.mxu0 0.0
  %78 = vmatprep.subr.mxu0 0.0
  %79 = vmatpush1.msra.mxu0 0.0
  %80 = vmatprep.subr.mxu0 0.0
  %81 = vmatpush1.msra.mxu0 0.0
  %82 = vmatprep.subr.mxu0 0.0
  %83 = vmatpush1.msra.mxu0 0.0
  %84 = vmatprep.subr.mxu0 0.0
  %85 = vmatpush1.msra.mxu0 0.0
  %86 = vmatprep.subr.mxu0 0.0
  %87 = vmatpush1.msra.mxu0 0.0
  %88 = vmatprep.subr.mxu0 0.0
  %89 = vmatpush1.msra.mxu0 0.0
  %90 = vmatprep.subr.mxu0 0.0
  %91 = vmatpush1.msra.mxu0 0.0
  %92 = vmatprep.subr.mxu0 0.0
  %93 = vmatpush1.msra.mxu0 0.0
  %94 = vmatprep.subr.mxu0 0.0
  %95 = vmatpush1.msra.mxu0 0.0
  %96 = vmatprep.subr.mxu0 0.0
  %97 = vmatpush1.msra.mxu0 0.0
  %98 = vmatprep.subr.mxu0 0.0
  %99 = vmatpush1.msra.mxu0 0.0
  %100 = vmatprep.subr.mxu0 0.0
  %101 = vmatpush1.msra.mxu0 0.0
  %102 = vmatprep.subr.mxu0 0.0
  %103 = vmatpush1.msra.mxu0 0.0
  %104 = vmatprep.subr.mxu0 0.0
  %105 = vmatpush1.msra.mxu0 0.0
  %106 = vmatprep.subr.mxu0 0.0
  %107 = vmatpush1.msra.mxu0 0.0
  %108 = vmatprep.subr.mxu0 0.0
  %109 = vmatpush1.msra.mxu0 0.0
  %110 = vmatprep.subr.mxu0 0.0
  %111 = vmatpush1.msra.mxu0 0.0
  %112 = vmatprep.subr.mxu0 0.0
  %113 = vmatpush1.msra.mxu0 0.0
  %114 = vmatprep.subr.mxu0 0.0
  %115 = vmatpush1.msra.mxu0 0.0
  %116 = vmatprep.subr.mxu0 0.0
  %117 = vmatpush1.msra.mxu0 0.0
  %118 = vmatprep.subr.mxu0 0.0
  %119 = vmatpush1.msra.mxu0 0.0
  %120 = vmatprep.subr.mxu0 0.0
  %121 = vmatpush1.msra.mxu0 0.0
  %122 = vmatprep.subr.mxu0 0.0
  %123 = vmatpush1.msra.mxu0 0.0
  %124 = vmatprep.subr.mxu0 0.0
  %125 = vmatpush1.msra.mxu0 0.0
  %126 = vmatprep.subr.mxu0 0.0
  %127 = vmatpush1.msra.mxu0 0.0
  %128 = vmatprep.subr.mxu0 0.0
  %129 = vmatpush1.msra.mxu0 0.0
  %130 = vmatprep.mubr.f32.mxu0 0.0
  %131 = vmatmul.mubr.f32.gmra.mrb[0].mxu0 %v51
  %v132 = vpop.f32.mrb[0].mxu0
  %v133 = vadd.f32 %v32, %v132
  %v134 = vpop.f32.mrb[0].mxu0
  %135 = vmatprep.mubr.f32.mxu0 0.0
  %136 = vmatmul.mubr.f32.gmra.mrb[0].mxu0 %v54
  %v137 = vpop.f32.mrb[0].mxu0
  %v138 = vadd.f32 %v37, %v137
  %v139 = vpop.f32.mrb[0].mxu0
  %140 = vmatprep.mubr.f32.mxu0 0.0
  %141 = vmatmul.mubr.f32.gmra.mrb[0].mxu0 %v57
  %v142 = vpop.f32.mrb[0].mxu0
  %v143 = vadd.f32 %v42, %v142
  %v144 = vpop.f32.mrb[0].mxu0
  %145 = vmatprep.mubr.f32.mxu0 0.0
  %146 = vmatmul.mubr.f32.gmra.mrb[0].mxu0 %v60
  %v147 = vpop.f32.mrb[0].mxu0
  %v148 = vadd.f32 %v47, %v147
  %v149 = vpop.f32.mrb[0].mxu0
  %150 = vdwg.mxu0
  %v151 = vmax.f32 %v133, 0.0
  %v152 = vmax.f32 %v138, 0.0
  %v153 = vmax.f32 %v143, 0.0
  %v154 = vmax.f32 %v148, 0.0
  %v155 = vld [vmem:[%s3] sm:$0x7]
  %v156 = vld [vmem:[%s4] sm:$0x7]
  %158 = vset.pattern.permute.xlu0 0
  %159 = vperm.xlu0 %158, %v156
  %v160 = vpop.permute.xlu0 %159
  %vm162 = vcmask 261120
  %v164 = vsel %vm162, %v155, 0
  %166 = vmatprep.subr.mxu0 0.0
  %167 = vmatpush1.msra.mxu0 %v151
  %168 = vmatprep.subr.mxu0 0.0
  %169 = vmatpush1.msra.mxu0 %v152
  %170 = vmatprep.subr.mxu0 0.0
  %171 = vmatpush1.msra.mxu0 %v153
  %172 = vmatprep.subr.mxu0 0.0
  %173 = vmatpush1.msra.mxu0 %v154
  %174 = vmatprep.subr.mxu0 0.0
  %175 = vmatpush1.msra.mxu0 0.0
  %176 = vmatprep.subr.mxu0 0.0
  %177 = vmatpush1.msra.mxu0 0.0
  %178 = vmatprep.subr.mxu0 0.0
  %179 = vmatpush1.msra.mxu0 0.0
  %180 = vmatprep.subr.mxu0 0.0
  %181 = vmatpush1.msra.mxu0 0.0
  %182 = vmatprep.subr.mxu0 0.0
  %183 = vmatpush1.msra.mxu0 0.0
  %184 = vmatprep.subr.mxu0 0.0
  %185 = vmatpush1.msra.mxu0 0.0
  %186 = vmatprep.subr.mxu0 0.0
  %187 = vmatpush1.msra.mxu0 0.0
  %188 = vmatprep.subr.mxu0 0.0
  %189 = vmatpush1.msra.mxu0 0.0
  %190 = vmatprep.subr.mxu0 0.0
  %191 = vmatpush1.msra.mxu0 0.0
  %192 = vmatprep.subr.mxu0 0.0
  %193 = vmatpush1.msra.mxu0 0.0
  %194 = vmatprep.subr.mxu0 0.0
  %195 = vmatpush1.msra.mxu0 0.0
  %196 = vmatprep.subr.mxu0 0.0
  %197 = vmatpush1.msra.mxu0 0.0
  %198 = vmatprep.subr.mxu0 0.0
  %199 = vmatpush1.msra.mxu0 0.0
  %200 = vmatprep.subr.mxu0 0.0
  %201 = vmatpush1.msra.mxu0 0.0
  %202 = vmatprep.subr.mxu0 0.0
  %203 = vmatpush1.msra.mxu0 0.0
  %204 = vmatprep.subr.mxu0 0.0
  %205 = vmatpush1.msra.mxu0 0.0
  %206 = vmatprep.subr.mxu0 0.0
  %207 = vmatpush1.msra.mxu0 0.0
  %208 = vmatprep.subr.mxu0 0.0
  %209 = vmatpush1.msra.mxu0 0.0
  %210 = vmatprep.subr.mxu0 0.0
  %211 = vmatpush1.msra.mxu0 0.0
  %212 = vmatprep.subr.mxu0 0.0
  %213 = vmatpush1.msra.mxu0 0.0
  %214 = vmatprep.subr.mxu0 0.0
  %215 = vmatpush1.msra.mxu0 0.0
  %216 = vmatprep.subr.mxu0 0.0
  %217 = vmatpush1.msra.mxu0 0.0
  %218 = vmatprep.subr.mxu0 0.0
  %219 = vmatpush1.msra.mxu0 0.0
  %220 = vmatprep.subr.mxu0 0.0
  %221 = vmatpush1.msra.mxu0 0.0
  %222 = vmatprep.subr.mxu0 0.0
  %223 = vmatpush1.msra.mxu0 0.0
  %224 = vmatprep.subr.mxu0 0.0
  %225 = vmatpush1.msra.mxu0 0.0
  %226 = vmatprep.subr.mxu0 0.0
  %227 = vmatpush1.msra.mxu0 0.0
  %228 = vmatprep.subr.mxu0 0.0
  %229 = vmatpush1.msra.mxu0 0.0
  %230 = vmatprep.mubr.f32.mxu0 0.0
  %231 = vmatmul.mubr.f32.gmra.mrb[0].mxu0 %v164
  %v232 = vpop.f32.mrb[0].mxu0
  %v233 = vadd.f32 %v160, %v232
  %v234 = vpop.f32.mrb[0].mxu0
  %235 = vdwg.mxu0
  %vm236 = vcmask 1042432
  %v237 = vsel %vm236, %v233, -inf
  %v238 = vrot.slane %v237, 4
  %v239 = vmax.f32 %v237, %v238
  %v240 = vrot.slane %v239, 2
  %v241 = vmax.f32 %v239, %v240
  %v242 = vrot.slane %v241, 1
  %v243 = vmax.f32 %v241, %v242
  %v244 = vsub.f32 %v233, %v243
  %v245 = vmul.f32 %v244, 1.442695
  %v246 = vpow.pop %v245
  %v247 = vsel %vm236, %v246, 0.0
  %v248 = vrot.slane %v247, 4
  %v249 = vadd.f32 %v247, %v248
  %v250 = vrot.slane %v249, 2
  %v251 = vadd.f32 %v249, %v250
  %v252 = vrot.slane %v251, 1
  %v253 = vadd.f32 %v251, %v252
  %v254 = vrcp.pop %v253
  %v255 = vmul.f32 1.0, %v254
  %v256 = vmul.f32 %v246, %v255
  %257 = vst [vmem:[%s5] sm:$0x7] %v256
  // Predicated region
  $region22: #{policy_acrobot_forward.1} parent=0 // pred_check
    _
  $region23: #{policy_acrobot_forward.1} parent=0 // pred_check_branch
    %259 = sbr.rel (0) target = $region25
  $region24: #{policy_acrobot_forward.1} parent=0 // pred_region
    _
  $region25: #{policy_acrobot_forward.1} parent=0 // pred_fallthru
    _
  // Predicated region
  $region26: #{policy_acrobot_forward.1} parent=0 // pred_check
    _
  $region27: #{policy_acrobot_forward.1} parent=0 // pred_check_branch
    %261 = sbr.rel (0) target = $region29
  $region28: #{policy_acrobot_forward.1} parent=0 // pred_region
    _
  $region29: #{policy_acrobot_forward.1} parent=0 // pred_fallthru
    _

</llo_original>
